<compile_context>
chip_gen: v6e
topology: v6e:2x2x1
jax: 0.10.0
libtpu: 0.0.40
codegen_flags: <defaults>
</compile_context>

<pallas_src>
import math

import jax
import jax.numpy as jnp
from jax.experimental import pallas as pl
from jax.experimental.pallas import tpu as pltpu

_LANE = 128  # TPU lane width


def _round_up(v, m):
    return ((v + m - 1) // m) * m


# ---------------------------------------------------------------------------
# Kernel: fused 2-layer MLP on pre-folded effective weights.
#   x:  (TB, D)      f32 or bf16 (bf16 preferred; fuse the cast upstream)
#   w1: (D,  H)      bf16  (pre-transposed, lane-dense)
#   b1: (1,  H)      f32
#   w2: (H,  O_pad)  bf16  (pre-transposed, output padded to a 128 multiple)
#   b2: (1,  O_pad)  f32
#   o:  (TB, O_pad)  f32   (lane-dense, unmasked stores; wrapper slices [:, :O])
# ---------------------------------------------------------------------------
def noisy_mlp_kernel(x_ref, w1_ref, b1_ref, w2_ref, b2_ref, o_ref):
    x = x_ref[...]
    if x.dtype != jnp.bfloat16:          # trace-time branch; no-op for bf16 input
        x = x.astype(jnp.bfloat16)

    # layer 1: linear (+bias) + ReLU, bf16 MXU inputs, f32 accumulation
    h = jnp.dot(x, w1_ref[...], preferred_element_type=jnp.float32)   # (TB, H)
    h = jnp.maximum(h + b1_ref[...], 0.0)

    # layer 2: linear (+bias), lane-dense padded output
    y = jnp.dot(h.astype(jnp.bfloat16), w2_ref[...],
                preferred_element_type=jnp.float32)                   # (TB, O_pad)
    o_ref[...] = (y + b2_ref[...]).astype(o_ref.dtype)


# ---------------------------------------------------------------------------
# Wrapper.
# ---------------------------------------------------------------------------
def _dense_forward(x, folded):
    """Small-batch fast path & matched-precision reference (same policy as kernel)."""
    xb = x.astype(jnp.bfloat16)
    h = jnp.dot(xb, folded["w1"], preferred_element_type=jnp.float32) + folded["b1"]
    h = jnp.maximum(h, 0.0)
    y = jnp.dot(h.astype(jnp.bfloat16), folded["w2"],
                preferred_element_type=jnp.float32) + folded["b2"]
    return y[:, : folded["out_dim"]]


def noisy_network_forward(x, folded, *, block_b=1024, min_pallas_batch=256,
                          force_pallas=False):
    """Forward pass.  `folded` comes from fold_noise() (amortized per reset_noise).

    x may be f32 or bf16 (bf16 halves the dominant HBM read for large batches).
    """
    B, D = x.shape
    w1, b1, w2, b2 = folded["w1"], folded["b1"], folded["w2"], folded["b2"]
    H = w1.shape[1]
    O_pad = w2.shape[1]
    O = folded["out_dim"]

    # Small-batch fast path: below ~256 rows the pallas_call is pure launch/DMA
    # latency; XLA's fused tiny matmul wins.
    if B < min_pallas_batch and not force_pallas:
        return _dense_forward(x, folded)

    # Batch tile: large tiles amortize the ~0.35us/grid-step overhead.  For larger
    # batches guarantee >=2 grid steps so the "parallel" axis can be split across
    # both TensorCores on v7x.  TB is a multiple of 256 (MXU / lane friendly), or
    # the full batch for small B (full-array block satisfies the (8,128) rule).
    if B <= 256:
        TB = B
    else:
        TB = min(block_b, _round_up(pl.cdiv(B, 2), 256))
    grid = (pl.cdiv(B, TB),)   # no host-side pad: boundary block is masked
                               # (rows independent, junk rows' stores dropped)

    flops = 2 * B * (D * H + H * O_pad)
    bytes_accessed = int(
        x.size * x.dtype.itemsize
        + w1.size * w1.dtype.itemsize + w2.size * w2.dtype.itemsize
        + b1.size * b1.dtype.itemsize + b2.size * b2.dtype.itemsize
        + B * O_pad * 4)

    # TODO(synk): if several heads / ensemble members / networks are evaluated
    # together, concatenate their layer-2 weights along the output dim in
    # fold_noise so the padded lanes carry real work (at K=16 / N<=32 the MXU is
    # underfilled; zero padding alone does not recover that throughput).
    # TODO(synk): mark the four weight/bias specs pipeline_mode=pl.Buffered(1)
    # (constant index_map -> dead double buffer) once hidden sizes are large
    # enough for resident-weight VMEM to matter; negligible at D=16/H=32.
    out = pl.pallas_call(
        noisy_mlp_kernel,
        out_shape=jax.ShapeDtypeStruct((B, O_pad), jnp.float32),
        grid_spec=pltpu.PrefetchScalarGridSpec(
            num_scalar_prefetch=0,
            grid=grid,
            in_specs=[
                pl.BlockSpec((TB, D), lambda i: (i, 0)),    # x tile per batch block
                pl.BlockSpec((D, H), lambda i: (0, 0)),     # weights resident
                pl.BlockSpec((1, H), lambda i: (0, 0)),
                pl.BlockSpec((H, O_pad), lambda i: (0, 0)),
                pl.BlockSpec((1, O_pad), lambda i: (0, 0)),
            ],
            out_specs=pl.BlockSpec((TB, O_pad), lambda i: (i, 0)),
        ),
        compiler_params=pltpu.CompilerParams(
            dimension_semantics=("parallel",)),             # both TCs on v7x
        cost_estimate=pl.CostEstimate(
            flops=flops, transcendentals=0, bytes_accessed=bytes_accessed),
    )(x, w1, b1, w2, b2)

    return out[:, :O]


# ---------------------------------------------------------------------------
# One-time folding of noisy parameters into effective weights (per reset_noise).
# Pre-transposes to (in, out), casts weights to bf16 (noise math stays f32) and
# pads the final output dim to a 128-lane multiple for lane-dense stores.
# ---------------------------------------------------------------------------
def fold_noise(params, *, training=True, weight_dtype=jnp.bfloat16, lane=_LANE):
    if training:
        w1 = params["w1_mu"] + params["w1_sigma"] * params["w1_eps"]
        b1 = params["b1_mu"] + params["b1_sigma"] * params["b1_eps"]
        w2 = params["w2_mu"] + params["w2_sigma"] * params["w2_eps"]
        b2 = params["b2_mu"] + params["b2_sigma"] * params["b2_eps"]
    else:  # eval mode of the PyTorch module: mu only
        w1, b1 = params["w1_mu"], params["b1_mu"]
        w2, b2 = params["w2_mu"], params["b2_mu"]

    out_dim = w2.shape[0]
    o_pad = _round_up(out_dim, lane)

    w1_t = w1.T.astype(weight_dtype)                       # (D, H)
    w2_t = w2.T.astype(weight_dtype)                       # (H, O)
    b1_r = b1.reshape(1, -1).astype(jnp.float32)           # (1, H)
    b2_r = b2.reshape(1, -1).astype(jnp.float32)           # (1, O)
    if o_pad != out_dim:
        w2_t = jnp.zeros((w2_t.shape[0], o_pad), weight_dtype).at[:, :out_dim].set(w2_t)
        b2_r = jnp.zeros((1, o_pad), jnp.float32).at[:, :out_dim].set(b2_r)

    return dict(w1=w1_t, b1=b1_r, w2=w2_t, b2=b2_r, out_dim=out_dim)


# ---------------------------------------------------------------------------
# Deterministic parameter / noise construction (mirrors NoisyLinear.__init__,
# reset_parametrs() and reset_noise(), with jax.random instead of torch RNG).
# ---------------------------------------------------------------------------
def _scale_noise(key, size):
    x = jax.random.normal(key, (size,), dtype=jnp.float32)
    return jnp.sign(x) * jnp.sqrt(jnp.abs(x))


def init_noisy_linear(key, in_features, out_features, std_init=0.1):
    k_wmu, k_bmu, k_ein, k_eout = jax.random.split(key, 4)
    mu_range = 1.0 / math.sqrt(in_features)

    weight_mu = jax.random.uniform(k_wmu, (out_features, in_features),
                                   minval=-mu_range, maxval=mu_range,
                                   dtype=jnp.float32)
    weight_sigma = jnp.full((out_features, in_features),
                            std_init / math.sqrt(in_features), jnp.float32)
    bias_mu = jax.random.uniform(k_bmu, (out_features,),
                                 minval=-mu_range, maxval=mu_range,
                                 dtype=jnp.float32)
    bias_sigma = jnp.full((out_features,),
                          std_init / math.sqrt(out_features), jnp.float32)

    eps_in = _scale_noise(k_ein, in_features)
    eps_out = _scale_noise(k_eout, out_features)
    weight_eps = jnp.outer(eps_out, eps_in)        # factorized Gaussian noise
    bias_eps = eps_out

    return dict(
        w_mu=weight_mu, w_sigma=weight_sigma, w_eps=weight_eps,
        b_mu=bias_mu.reshape(1, -1), b_sigma=bias_sigma.reshape(1, -1),
        b_eps=bias_eps.reshape(1, -1),
    )


def init_noisy_network(key, in_dim, out_dim, hidden, std):
    k1, k2 = jax.random.split(key)
    l1 = init_noisy_linear(k1, in_dim, hidden, std)
    l2 = init_noisy_linear(k2, hidden, out_dim, std)
    return {
        "w1_mu": l1["w_mu"], "w1_sigma": l1["w_sigma"], "w1_eps": l1["w_eps"],
        "b1_mu": l1["b_mu"], "b1_sigma": l1["b_sigma"], "b1_eps": l1["b_eps"],
        "w2_mu": l2["w_mu"], "w2_sigma": l2["w_sigma"], "w2_eps": l2["w_eps"],
        "b2_mu": l2["b_mu"], "b2_sigma": l2["b_sigma"], "b2_eps": l2["b_eps"],
    }


# ---------------------------------------------------------------------------
# References.
# ---------------------------------------------------------------------------
def reference_forward_f32(x, p):
    """Pure-JAX f32 reference of the PyTorch forward (training mode)."""
    w1 = p["w1_mu"] + p["w1_sigma"] * p["w1_eps"]
    b1 = p["b1_mu"] + p["b1_sigma"] * p["b1_eps"]
    w2 = p["w2_mu"] + p["w2_sigma"] * p["w2_eps"]
    b2 = p["b2_mu"] + p["b2_sigma"] * p["b2_eps"]
    h = jnp.maximum(x.astype(jnp.float32) @ w1.T + b1, 0.0)
    return h @ w2.T + b2


if __name__ == "__main__":
    # NoisyNetwork(in_dim=16, out_dim=4, configs={'arch': [16, 32], 'std': 0.1})
    B, IN_DIM, HIDDEN, OUT_DIM, STD = 8, 16, 32, 4, 0.1

    key = jax.random.PRNGKey(0)
    k_params, k_x, k_x2 = jax.random.split(key, 3)

    params = init_noisy_network(k_params, IN_DIM, OUT_DIM, HIDDEN, STD)
    folded = fold_noise(params, training=True)     # once per reset_noise()

    # --- small batch: force the Pallas kernel path (single full-array block) ---
    x = jax.random.normal(k_x, (B, IN_DIM), dtype=jnp.float32)
    y = jax.block_until_ready(noisy_network_forward(x, folded, force_pallas=True))
    y_matched = _dense_forward(x, folded)          # matched-precision reference
    y_f32 = reference_forward_f32(x, params)       # PyTorch f32 semantics
    assert y.shape == (B, OUT_DIM)
    assert jnp.allclose(y, y_matched, atol=1e-4, rtol=1e-4), \
        "mismatch vs matched-precision reference"
    assert jnp.allclose(y, y_f32, atol=5e-2, rtol=5e-2), \
        "mismatch vs f32 PyTorch-semantics reference (bf16 matmul tolerance)"

    # --- larger ragged batch: 2-step parallel grid (v7x), masked boundary block,
    #     bf16 input contract (cast fused upstream) ---
    B2 = 500
    x2 = jax.random.normal(k_x2, (B2, IN_DIM), jnp.float32).astype(jnp.bfloat16)
    y2 = jax.block_until_ready(noisy_network_forward(x2, folded))
    y2_matched = _dense_forward(x2, folded)
    assert y2.shape == (B2, OUT_DIM)
    assert jnp.allclose(y2, y2_matched, atol=1e-4, rtol=1e-4), \
        "mismatch vs matched-precision reference (large batch)"

    # --- small-batch fast path (no pallas_call) agrees with the kernel path ---
    y_fastpath = noisy_network_forward(x, folded)
    assert jnp.allclose(y_fastpath, y, atol=1e-4, rtol=1e-4), \
        "fast path disagrees with kernel path"

    print("KERNEL_OK")
</pallas_src>

<mosaic_0001>
module attributes {stable_mosaic.version = 11 : i64} {
  func.func @noisy_mlp_kernel(%arg0: i32, %arg1: memref<8x16xf32, #tpu.memory_space<vmem>>, %arg2: memref<16x32xbf16, #tpu.memory_space<vmem>>, %arg3: memref<1x32xf32, #tpu.memory_space<vmem>>, %arg4: memref<32x128xbf16, #tpu.memory_space<vmem>>, %arg5: memref<1x128xf32, #tpu.memory_space<vmem>>, %arg6: memref<8x128xf32, #tpu.memory_space<vmem>>) attributes {dimension_semantics = [#tpu.dimension_semantics<parallel>], iteration_bounds = array<i64: 1>, scalar_prefetch = 0 : i64, scratch_operands = 0 : i64, tpu.core_type = #tpu.core_type<tc>, window_params = [{transform_indices = @transform_0, window_bounds = array<i64: 8, 16>}, {pipeline_mode = #tpu.pipeline_mode<synchronous>, transform_indices = @transform_1, window_bounds = array<i64: 16, 32>}, {pipeline_mode = #tpu.pipeline_mode<synchronous>, transform_indices = @transform_2, window_bounds = array<i64: 1, 32>}, {pipeline_mode = #tpu.pipeline_mode<synchronous>, transform_indices = @transform_3, window_bounds = array<i64: 32, 128>}, {pipeline_mode = #tpu.pipeline_mode<synchronous>, transform_indices = @transform_4, window_bounds = array<i64: 1, 128>}, {transform_indices = @transform_5, window_bounds = array<i64: 8, 128>}]} {
    %c0 = arith.constant 0 : index
    %c0_0 = arith.constant 0 : index
    %0 = vector.load %arg1[%c0, %c0_0] : memref<8x16xf32, #tpu.memory_space<vmem>>, vector<8x16xf32>
    %1 = arith.truncf %0 : vector<8x16xf32> to vector<8x16xbf16>
    %c0_1 = arith.constant 0 : index
    %c0_2 = arith.constant 0 : index
    %2 = vector.load %arg2[%c0_1, %c0_2] : memref<16x32xbf16, #tpu.memory_space<vmem>>, vector<16x32xbf16>
    %cst = arith.constant dense<0.000000e+00> : vector<8x32xf32>
    %3 = tpu.matmul %1, %2, %cst {dimension_numbers = #tpu.dot_dimension_numbers<[1], [0], [0], [1], [0, 0, 1, 1], [], []>} : vector<8x16xbf16>, vector<16x32xbf16>, vector<8x32xf32> -> vector<8x32xf32>
    %c0_3 = arith.constant 0 : index
    %c0_4 = arith.constant 0 : index
    %4 = vector.load %arg3[%c0_3, %c0_4] : memref<1x32xf32, #tpu.memory_space<vmem>>, vector<1x32xf32>
    %5 = vector.broadcast %4 : vector<1x32xf32> to vector<8x32xf32>
    %6 = arith.addf %3, %5 : vector<8x32xf32>
    %cst_5 = arith.constant 0.000000e+00 : f32
    %7 = vector.broadcast %cst_5 : f32 to vector<8x32xf32>
    %8 = arith.maximumf %6, %7 : vector<8x32xf32>
    %9 = arith.truncf %8 : vector<8x32xf32> to vector<8x32xbf16>
    %c0_6 = arith.constant 0 : index
    %c0_7 = arith.constant 0 : index
    %10 = vector.load %arg4[%c0_6, %c0_7] : memref<32x128xbf16, #tpu.memory_space<vmem>>, vector<32x128xbf16>
    %cst_8 = arith.constant dense<0.000000e+00> : vector<8x128xf32>
    %11 = tpu.matmul %9, %10, %cst_8 {dimension_numbers = #tpu.dot_dimension_numbers<[1], [0], [0], [1], [0, 0, 1, 1], [], []>} : vector<8x32xbf16>, vector<32x128xbf16>, vector<8x128xf32> -> vector<8x128xf32>
    %c0_9 = arith.constant 0 : index
    %c0_10 = arith.constant 0 : index
    %12 = vector.load %arg5[%c0_9, %c0_10] : memref<1x128xf32, #tpu.memory_space<vmem>>, vector<1x128xf32>
    %13 = vector.broadcast %12 : vector<1x128xf32> to vector<8x128xf32>
    %14 = arith.addf %11, %13 : vector<8x128xf32>
    %c0_11 = arith.constant 0 : index
    %c0_12 = arith.constant 0 : index
    %15 = vector.load %arg6[%c0_11, %c0_12] : memref<8x128xf32, #tpu.memory_space<vmem>>, vector<8x128xf32>
    tpu.vector_store %arg6[%c0_11, %c0_12], %14 {strides = array<i32>} : memref<8x128xf32, #tpu.memory_space<vmem>>, vector<8x128xf32>,
    return
  }
  func.func @transform_0(%arg0: i32) -> (i32, i32) {
    %c0_i32 = arith.constant 0 : i32
    %c0_i32_0 = arith.constant 0 : i32
    return %arg0, %c0_i32 : i32, i32
  }
  func.func @transform_1(%arg0: i32) -> (i32, i32) {
    %c0_i32 = arith.constant 0 : i32
    %c0_i32_0 = arith.constant 0 : i32
    %c0_i32_1 = arith.constant 0 : i32
    return %c0_i32, %c0_i32_0 : i32, i32
  }
  func.func @transform_2(%arg0: i32) -> (i32, i32) {
    %c0_i32 = arith.constant 0 : i32
    %c0_i32_0 = arith.constant 0 : i32
    %c0_i32_1 = arith.constant 0 : i32
    return %c0_i32, %c0_i32_0 : i32, i32
  }
  func.func @transform_3(%arg0: i32) -> (i32, i32) {
    %c0_i32 = arith.constant 0 : i32
    %c0_i32_0 = arith.constant 0 : i32
    %c0_i32_1 = arith.constant 0 : i32
    return %c0_i32, %c0_i32_0 : i32, i32
  }
  func.func @transform_4(%arg0: i32) -> (i32, i32) {
    %c0_i32 = arith.constant 0 : i32
    %c0_i32_0 = arith.constant 0 : i32
    %c0_i32_1 = arith.constant 0 : i32
    return %c0_i32, %c0_i32_0 : i32, i32
  }
  func.func @transform_5(%arg0: i32) -> (i32, i32) {
    %c0_i32 = arith.constant 0 : i32
    %c0_i32_0 = arith.constant 0 : i32
    return %arg0, %c0_i32 : i32, i32
  }
}

</mosaic_0001>

<llo_original>
// kernel: tpu_custom_call.1
$region0: #{tpu_custom_call.1}
  #allocation0 [shape = 'u32[]', space=smem, size = 0x4, offset = 0x4, fixed_abs, tag = 'smem constant byte address 0x4 - core index']
  #allocation1 [shape = 'u32[144,128]{1,0:T(1,128)}', space=vmem, size = 0x12000, scoped, tag = 'internal scratch']
  %s0 = inlined_call_operand.hbm [shape: f32[8,16], index: 0, kind: input, shape index: {}]
  %s1 = inlined_call_operand.hbm [shape: bf16[16,32], index: 1, kind: input, shape index: {}]
  %s2 = inlined_call_operand.vmem [shape: f32[1,32], index: 2, kind: input, shape index: {}]
  %s3 = inlined_call_operand.hbm [shape: bf16[32,128], index: 3, kind: input, shape index: {}]
  %s4 = inlined_call_operand.vmem [shape: f32[1,128], index: 4, kind: input, shape index: {}]
  %s5 = inlined_call_operand.hbm [shape: f32[8,128], index: 5, kind: output, shape index: {}]
  %s6 = sld [smem:[#allocation0]]
  $region42: #{tpu_custom_call.1} parent=0
    _
  %s8 = ssub.s32 1, %s6
  %s9 = scalar_select 0, %s8, %s6
  $region1: #{tpu_custom_call.1} parent=0
    #allocation2 [shape = 'u8[4096]{0}', space=vmem, size = 0x1000, scoped, tag = 'input window, operand 0, single buffered']
    #allocation3 [shape = 's32[1]{0}', space=sflag, size = 0x4, scoped, tag = 'scoped memory for tpu_custom_call.1']
    #allocation4 [shape = 's32[1]{0}', space=sflag, size = 0x4, scoped, tag = 'scoped memory for tpu_custom_call.1']
    #allocation5 [shape = 'u8[4096]{0}', space=vmem, size = 0x1000, scoped, tag = 'input window, operand 1, single buffered']
    #allocation6 [shape = 's32[1]{0}', space=sflag, size = 0x4, scoped, tag = 'scoped memory for tpu_custom_call.1']
    #allocation7 [shape = 'u8[8192]{0}', space=vmem, size = 0x2000, scoped, tag = 'input window, operand 3, single buffered']
    #allocation8 [shape = 'u8[4096]{0}', space=vmem, size = 0x1000, scoped, tag = 'output window, operand 0, single buffered']
    %10 = vsyncpa [#allocation3], 0
    %11 = vsyncpa [#allocation6], 0
    %12 = vsyncpa [#allocation4], 0
    // Predicated region
    $region2: #{tpu_custom_call.1} parent=1 // pred_check
      _
    $region3: #{tpu_custom_call.1} parent=1 // pred_check_branch
      %14 = sbr.rel (0) target = $region5
    $region4: #{tpu_custom_call.1} parent=1 // pred_region
      %s16 = ssub.s32 128, 128
      %17 = vsyncadd [#allocation3], %s16
      %s19 = sshll.u32 [#allocation2], 4
      %s20 = int_to_ptr.vmem [resolvable:$true] %s19
      %22 = dma.hbm_to_vmem [thread:$0]  %s0, 128, %s20, [#allocation3]
    $region5: #{tpu_custom_call.1} parent=1 // pred_fallthru
      _
    // Predicated region
    $region6: #{tpu_custom_call.1} parent=1 // pred_check
      _
    $region7: #{tpu_custom_call.1} parent=1 // pred_check_branch
      %24 = sbr.rel (0) target = $region9
    $region8: #{tpu_custom_call.1} parent=1 // pred_region
      %s26 = ssub.s32 128, 128
      %27 = vsyncadd [#allocation6], %s26
      %s28 = sshll.u32 [#allocation5], 4
      %s29 = int_to_ptr.vmem [resolvable:$true] %s28
      %34 = dma.hbm_to_vmem [thread:$0]  %s1, 128, %s29, [#allocation6], 64, 64, 4
    $region9: #{tpu_custom_call.1} parent=1 // pred_fallthru
      _
    // Predicated region
    $region10: #{tpu_custom_call.1} parent=1 // pred_check
      _
    $region11: #{tpu_custom_call.1} parent=1 // pred_check_branch
      %36 = sbr.rel (0) target = $region13
    $region12: #{tpu_custom_call.1} parent=1 // pred_region
      _
    $region13: #{tpu_custom_call.1} parent=1 // pred_fallthru
      _
    // Predicated region
    $region14: #{tpu_custom_call.1} parent=1 // pred_check
      _
    $region15: #{tpu_custom_call.1} parent=1 // pred_check_branch
      %38 = sbr.rel (0) target = $region17
    $region16: #{tpu_custom_call.1} parent=1 // pred_region
      %s40 = ssub.s32 256, 256
      %41 = vsyncadd [#allocation6], %s40
      %s42 = sshll.u32 [#allocation7], 4
      %s43 = int_to_ptr.vmem [resolvable:$true] %s42
      %48 = dma.hbm_to_vmem [thread:$0]  %s3, 256, %s43, [#allocation6], 64, 64, 4
    $region17: #{tpu_custom_call.1} parent=1 // pred_fallthru
      _
    // Predicated region
    $region18: #{tpu_custom_call.1} parent=1 // pred_check
      _
    $region19: #{tpu_custom_call.1} parent=1 // pred_check_branch
      %50 = sbr.rel (0) target = $region21
    $region20: #{tpu_custom_call.1} parent=1 // pred_region
      _
    $region21: #{tpu_custom_call.1} parent=1 // pred_fallthru
      _
    // Predicated region
    $region22: #{tpu_custom_call.1} parent=1 // pred_check
      _
    $region23: #{tpu_custom_call.1} parent=1 // pred_check_branch
      %52 = sbr.rel (0) target = $region25
    $region24: #{tpu_custom_call.1} parent=1 // pred_region
      %53 = dma.done [#allocation3], 128
    $region25: #{tpu_custom_call.1} parent=1 // pred_fallthru
      _
    // Predicated region
    $region26: #{tpu_custom_call.1} parent=1 // pred_check
      _
    $region27: #{tpu_custom_call.1} parent=1 // pred_check_branch
      %55 = sbr.rel (0) target = $region29
    $region28: #{tpu_custom_call.1} parent=1 // pred_region
      %56 = dma.done [#allocation6], 128
    $region29: #{tpu_custom_call.1} parent=1 // pred_fallthru
      _
    // Predicated region
    $region30: #{tpu_custom_call.1} parent=1 // pred_check
      _
    $region31: #{tpu_custom_call.1} parent=1 // pred_check_branch
      %58 = sbr.rel (0) target = $region33
    $region32: #{tpu_custom_call.1} parent=1 // pred_region
      %59 = dma.done [#allocation6], 256
    $region33: #{tpu_custom_call.1} parent=1 // pred_fallthru
      _
    %v61 = vld [vmem:[#allocation2] sm:$0xff]
    %v62 = vpack.c.bf16 %v61, %v61
    %v63 = vld [vmem:[#allocation5] sm:$0xf]
    %v64 = vld [vmem:[#allocation5 + $0x4] sm:$0xf]
    %v65 = vld [vmem:[%s2] sm:$0x1]
    %v67 = vlaneseq
    %v68 = vshrl.u32 %v67, 7
    %v69 = vsub.s32 0, %v68
    %v70 = vrot.slane %v65, %v69
    %v74 = vunpack.c.l.b16 %v63
    %v75 = vunpack.c.l.b16 %v64
    %v76 = vpack.c.b16 %v75, %v74
    %vm78 = vcmask 130048
    %v80 = vsel %vm78, %v62, 0
    %82 = vmatprep.subr.bf16.mxu0 0
    %83 = vmatpush1.bf16.msra.mxu0 0
    %84 = vmatprep.subr.bf16.mxu0 0
    %85 = vmatpush1.bf16.msra.mxu0 0
    %86 = vmatprep.subr.bf16.mxu0 0
    %87 = vmatpush1.bf16.msra.mxu0 0
    %88 = vmatprep.subr.bf16.mxu0 0
    %89 = vmatpush1.bf16.msra.mxu0 0
    %90 = vmatprep.subr.bf16.mxu0 0
    %91 = vmatpush1.bf16.msra.mxu0 0
    %92 = vmatprep.subr.bf16.mxu0 0
    %93 = vmatpush1.bf16.msra.mxu0 0
    %94 = vmatprep.subr.bf16.mxu0 0
    %95 = vmatpush1.bf16.msra.mxu0 0
    %96 = vmatprep.subr.bf16.mxu0 0
    %97 = vmatpush1.bf16.msra.mxu0 %v76
    %98 = vmatprep.subr.bf16.mxu0 0
    %99 = vmatpush2.bf16.msra.mxu0 0
    %100 = vmatprep.subr.bf16.mxu0 0
    %101 = vmatpush2.bf16.msra.mxu0 0
    %102 = vmatprep.subr.bf16.mxu0 0
    %103 = vmatpush2.bf16.msra.mxu0 0
    %104 = vmatprep.subr.bf16.mxu0 0
    %105 = vmatpush2.bf16.msra.mxu0 0
    %106 = vmatprep.subr.bf16.mxu0 0
    %107 = vmatpush2.bf16.msra.mxu0 0
    %108 = vmatprep.subr.bf16.mxu0 0
    %109 = vmatpush2.bf16.msra.mxu0 0
    %110 = vmatprep.subr.bf16.mxu0 0
    %111 = vmatpush2.bf16.msra.mxu0 0
    %112 = vmatprep.subr.bf16.mxu0 0
    %113 = vmatpush2.bf16.msra.mxu0 0
    %114 = vmatprep.mubr.bf16.mxu0 0
    %115 = vmatmul.mubr.bf16.gmra.mxu0 %v80
    %v116 = vpop.f32.mrf.mxu0
    %v117 = vadd.f32 %v70, %v116
    %v118 = vpop.f32.mrf.mxu0
    %v119 = vpop.f32.mrf.mxu0
    %v120 = vpop.f32.mrf.mxu0
    %121 = vdwg.mxu0
    %v122 = vmax.f32 %v117, 0.0
    %v123 = vpack.c.bf16 %v122, %v122
    %v124 = vld [vmem:[#allocation7] sm:$0xf]
    %v125 = vld [vmem:[#allocation7 + $0x4] sm:$0xf]
    %v126 = vld [vmem:[#allocation7 + $0x8] sm:$0xf]
    %v127 = vld [vmem:[#allocation7 + $0xc] sm:$0xf]
    %v128 = vld [vmem:[%s4] sm:$0x1]
    %v130 = vlaneseq
    %v131 = vshrl.u32 %v130, 7
    %v132 = vsub.s32 0, %v131
    %v133 = vrot.slane %v128, %v132
    %v139 = vunpack.c.l.b16 %v124
    %v140 = vunpack.c.l.b16 %v125
    %v141 = vunpack.c.l.b16 %v126
    %v142 = vunpack.c.l.b16 %v127
    %v143 = vpack.c.b16 %v140, %v139
    %v144 = vpack.c.b16 %v142, %v141
    %vm147 = vcmask 261120
    %v149 = vsel %vm147, %v123, 0
    %151 = vmatprep.subr.bf16.mxu0 0
    %152 = vmatpush1.bf16.msra.mxu0 0
    %153 = vmatprep.subr.bf16.mxu0 0
    %154 = vmatpush1.bf16.msra.mxu0 0
    %155 = vmatprep.subr.bf16.mxu0 0
    %156 = vmatpush1.bf16.msra.mxu0 0
    %157 = vmatprep.subr.bf16.mxu0 0
    %158 = vmatpush1.bf16.msra.mxu0 0
    %159 = vmatprep.subr.bf16.mxu0 0
    %160 = vmatpush1.bf16.msra.mxu0 0
    %161 = vmatprep.subr.bf16.mxu0 0
    %162 = vmatpush1.bf16.msra.mxu0 0
    %163 = vmatprep.subr.bf16.mxu0 0
    %164 = vmatpush1.bf16.msra.mxu0 %v144
    %165 = vmatprep.subr.bf16.mxu0 0
    %166 = vmatpush1.bf16.msra.mxu0 %v143
    %167 = vmatprep.subr.bf16.mxu0 0
    %168 = vmatpush2.bf16.msra.mxu0 0
    %169 = vmatprep.subr.bf16.mxu0 0
    %170 = vmatpush2.bf16.msra.mxu0 0
    %171 = vmatprep.subr.bf16.mxu0 0
    %172 = vmatpush2.bf16.msra.mxu0 0
    %173 = vmatprep.subr.bf16.mxu0 0
    %174 = vmatpush2.bf16.msra.mxu0 0
    %175 = vmatprep.subr.bf16.mxu0 0
    %176 = vmatpush2.bf16.msra.mxu0 0
    %177 = vmatprep.subr.bf16.mxu0 0
    %178 = vmatpush2.bf16.msra.mxu0 0
    %179 = vmatprep.subr.bf16.mxu0 0
    %180 = vmatpush2.bf16.msra.mxu0 0
    %181 = vmatprep.subr.bf16.mxu0 0
    %182 = vmatpush2.bf16.msra.mxu0 0
    %183 = vmatprep.mubr.bf16.mxu0 0
    %184 = vmatmul.mubr.bf16.gmra.mxu0 %v149
    %v185 = vpop.f32.mrf.mxu0
    %v186 = vadd.f32 %v133, %v185
    %v187 = vpop.f32.mrf.mxu0
    %v188 = vpop.f32.mrf.mxu0
    %v189 = vpop.f32.mrf.mxu0
    %190 = vdwg.mxu0
    %191 = vst [vmem:[#allocation8] sm:$0xff] %v186
    // Predicated region
    $region34: #{tpu_custom_call.1} parent=1 // pred_check
      _
    $region35: #{tpu_custom_call.1} parent=1 // pred_check_branch
      %193 = sbr.rel (0) target = $region37
    $region36: #{tpu_custom_call.1} parent=1 // pred_region
      %s195 = ssub.s32 128, 128
      %196 = vsyncadd [#allocation4], %s195
      %s198 = sshll.u32 [#allocation8], 4
      %s199 = int_to_ptr.vmem [resolvable:$true] %s198
      %201 = dma.vmem_to_hbm [thread:$0]  %s199, 128, %s5, [#allocation4]
    $region37: #{tpu_custom_call.1} parent=1 // pred_fallthru
      _
    // Predicated region
    $region38: #{tpu_custom_call.1} parent=1 // pred_check
      _
    $region39: #{tpu_custom_call.1} parent=1 // pred_check_branch
      %203 = sbr.rel (0) target = $region41
    $region40: #{tpu_custom_call.1} parent=1 // pred_region
      %204 = dma.done [#allocation4], 128
    $region41: #{tpu_custom_call.1} parent=1 // pred_fallthru
      _
    %205 = vsyncpa [#allocation3], 1
    %206 = vsyncpa [#allocation6], 1
    %207 = vsyncpa [#allocation4], 1

</llo_original>
